<compile_context>
chip_gen: v7x
topology: tpu7x:2x2x1
jax: 0.10.0
libtpu: 0.0.40
codegen_flags: <defaults>
</compile_context>

<pallas_src>
import functools

import jax
import jax.numpy as jnp
from jax.experimental import pallas as pl
from jax.experimental.pallas import tpu as pltpu

SUBLANE = 8
_MIN_SPLIT_TILE = 512  # force >= 2 grid steps (v7x: use both TCs) once Bp >= 2*this


def _round_up(n, m):
    return ((n + m - 1) // m) * m


def mlp_kernel(x_ref, w1_ref, b1_ref, w2_ref, b2_ref, w3_ref, b3_ref, o_ref):
    """relu(x@W1+b1) -> relu(.@W2+b2) -> .@W3+b3   (true output width, no padding)."""
    x = x_ref[...]
    h1 = jnp.dot(x, w1_ref[...], preferred_element_type=jnp.float32) + b1_ref[...]
    h1 = jnp.maximum(h1, 0.0)
    h2 = (
        jnp.dot(h1.astype(w2_ref.dtype), w2_ref[...], preferred_element_type=jnp.float32)
        + b2_ref[...]
    )
    h2 = jnp.maximum(h2, 0.0)
    o_ref[...] = (
        jnp.dot(h2.astype(w3_ref.dtype), w3_ref[...], preferred_element_type=jnp.float32)
        + b3_ref[...]
    ).astype(o_ref.dtype)


@functools.partial(jax.jit, static_argnames=("tb_max",))
def mlp_forward(x, params, tb_max=1024):
    w1, b1, w2, b2, w3, b3 = params
    B, in_features = x.shape
    out_features = w3.shape[1]

    # bf16 option (v6e/v7x): if the prepared weights are bf16, read x as bf16 too
    # (halves the x HBM read).  No-op cast for the default f32 params.
    x = x.astype(w1.dtype)

    # --- Batch tiling -------------------------------------------------------
    # TB is always a multiple of 8 (sublane rule).  For large batches guarantee
    # at least 2 grid steps so dimension_semantics=("parallel",) can shard the
    # batch axis across both v7x TensorCores; tiles are balanced to minimize
    # padding waste.
    tb_max = max(SUBLANE, _round_up(tb_max, SUBLANE))
    bp8 = _round_up(B, SUBLANE)
    nsteps = pl.cdiv(bp8, tb_max)
    if bp8 >= 2 * _MIN_SPLIT_TILE:
        nsteps = max(nsteps, 2)
    TB = _round_up(pl.cdiv(bp8, nsteps), SUBLANE)
    nsteps = pl.cdiv(bp8, TB)
    Bp = TB * nsteps

    xp = jnp.pad(x, ((0, Bp - B), (0, 0))) if Bp != B else x

    out = pl.pallas_call(
        mlp_kernel,
        out_shape=jax.ShapeDtypeStruct((Bp, out_features), jnp.float32),
        grid=(nsteps,),
        in_specs=[
            # x: tiled along the batch axis -> pipelined / double-buffered.
            pl.BlockSpec((TB, in_features), lambda i: (i, 0)),
            # Weights & biases: constant index_map -> DMA'd once, resident in VMEM.
            pl.BlockSpec(w1.shape, lambda i: (0, 0)),
            pl.BlockSpec(b1.shape, lambda i: (0, 0)),
            pl.BlockSpec(w2.shape, lambda i: (0, 0)),
            pl.BlockSpec(b2.shape, lambda i: (0, 0)),
            pl.BlockSpec(w3.shape, lambda i: (0, 0)),
            pl.BlockSpec(b3.shape, lambda i: (0, 0)),
        ],
        # True-width (TB, out_features) output tile: minimal HBM writeback.
        out_specs=pl.BlockSpec((TB, out_features), lambda i: (i, 0)),
        compiler_params=pltpu.CompilerParams(
            dimension_semantics=("parallel",),  # shards grid across TCs on v7x
        ),
    )(xp, w1, b1, w2, b2, w3, b3)

    return out[:B, :] if Bp != B else out


def init_params(key, in_features=4, h1=8, h2=9, out_features=3):
    """Deterministic init mimicking nn.Linear's U(-1/sqrt(fan_in), 1/sqrt(fan_in))."""
    ks = jax.random.split(key, 6)

    def linear(kw, kb, fan_in, fan_out):
        bound = 1.0 / jnp.sqrt(fan_in)
        w = jax.random.uniform(kw, (fan_in, fan_out), jnp.float32, -bound, bound)
        b = jax.random.uniform(kb, (1, fan_out), jnp.float32, -bound, bound)
        return w, b

    w1, b1 = linear(ks[0], ks[1], in_features, h1)
    w2, b2 = linear(ks[2], ks[3], h1, h2)
    w3, b3 = linear(ks[4], ks[5], h2, out_features)
    return (w1, b1, w2, b2, w3, b3)


def prepare_params(params, compute_dtype=jnp.float32):
    """One-time weight cast, hoisted out of the per-call path. Biases stay f32."""
    w1, b1, w2, b2, w3, b3 = params
    return (
        w1.astype(compute_dtype), b1,
        w2.astype(compute_dtype), b2,
        w3.astype(compute_dtype), b3,
    )


def mlp_reference(x, params):
    w1, b1, w2, b2, w3, b3 = params
    h1 = jax.nn.relu(x @ w1 + b1)
    h2 = jax.nn.relu(h1 @ w2 + b2)
    return h2 @ w3 + b3


if __name__ == "__main__":
    key = jax.random.PRNGKey(0)
    kx, kp, kx2 = jax.random.split(key, 3)

    params = init_params(kp, in_features=4, h1=8, h2=9, out_features=3)

    # Small batch, deliberately not a tile multiple: exercises batch padding and
    # the multi-step grid path (tb_max=16 -> TB=16, grid=(2,)).
    B, in_features = 30, 4
    x = jax.random.normal(kx, (B, in_features), jnp.float32)
    ref = mlp_reference(x, params)

    out = jax.block_until_ready(mlp_forward(x, params, tb_max=16))
    assert out.shape == (B, 3), out.shape
    assert jnp.allclose(out, ref, atol=1e-5, rtol=1e-5), "mismatch (tb_max=16)"

    # Default config (single small tile for this tiny batch).
    out_default = jax.block_until_ready(mlp_forward(x, params))
    assert jnp.allclose(out_default, ref, atol=1e-5, rtol=1e-5), "mismatch (default)"

    # Larger batch: exercises the forced >=2-step grid (v7x megacore path).
    B2 = 1500
    x2 = jax.random.normal(kx2, (B2, in_features), jnp.float32)
    ref2 = mlp_reference(x2, params)
    out2 = jax.block_until_ready(mlp_forward(x2, params))
    assert out2.shape == (B2, 3), out2.shape
    assert jnp.allclose(out2, ref2, atol=1e-5, rtol=1e-5), "mismatch (large batch)"

    # Optional bf16 weight/activation path (v6e/v7x MXU-native, halves x HBM read).
    params_bf16 = prepare_params(params, jnp.bfloat16)
    out_bf16 = jax.block_until_ready(mlp_forward(x2, params_bf16))
    assert jnp.allclose(out_bf16, ref2, atol=1e-1, rtol=1e-1), "mismatch (bf16 path)"

    print("KERNEL_OK")
</pallas_src>

<mosaic_0001>
module attributes {stable_mosaic.version = 11 : i64} {
  func.func @mlp_kernel(%arg0: i32, %arg1: memref<16x4xf32, #tpu.memory_space<vmem>>, %arg2: memref<4x8xf32, #tpu.memory_space<vmem>>, %arg3: memref<1x8xf32, #tpu.memory_space<vmem>>, %arg4: memref<8x9xf32, #tpu.memory_space<vmem>>, %arg5: memref<1x9xf32, #tpu.memory_space<vmem>>, %arg6: memref<9x3xf32, #tpu.memory_space<vmem>>, %arg7: memref<1x3xf32, #tpu.memory_space<vmem>>, %arg8: memref<16x3xf32, #tpu.memory_space<vmem>>) attributes {dimension_semantics = [#tpu.dimension_semantics<parallel>], iteration_bounds = array<i64: 2>, scalar_prefetch = 0 : i64, scratch_operands = 0 : i64, tpu.core_type = #tpu.core_type<tc>, window_params = [{transform_indices = @transform_0, window_bounds = array<i64: 16, 4>}, {pipeline_mode = #tpu.pipeline_mode<synchronous>, transform_indices = @transform_1, window_bounds = array<i64: 4, 8>}, {pipeline_mode = #tpu.pipeline_mode<synchronous>, transform_indices = @transform_2, window_bounds = array<i64: 1, 8>}, {pipeline_mode = #tpu.pipeline_mode<synchronous>, transform_indices = @transform_3, window_bounds = array<i64: 8, 9>}, {pipeline_mode = #tpu.pipeline_mode<synchronous>, transform_indices = @transform_4, window_bounds = array<i64: 1, 9>}, {pipeline_mode = #tpu.pipeline_mode<synchronous>, transform_indices = @transform_5, window_bounds = array<i64: 9, 3>}, {pipeline_mode = #tpu.pipeline_mode<synchronous>, transform_indices = @transform_6, window_bounds = array<i64: 1, 3>}, {transform_indices = @transform_7, window_bounds = array<i64: 16, 3>}]} {
    %c0 = arith.constant 0 : index
    %c0_0 = arith.constant 0 : index
    %0 = vector.load %arg1[%c0, %c0_0] : memref<16x4xf32, #tpu.memory_space<vmem>>, vector<16x4xf32>
    %c0_1 = arith.constant 0 : index
    %c0_2 = arith.constant 0 : index
    %1 = vector.load %arg2[%c0_1, %c0_2] : memref<4x8xf32, #tpu.memory_space<vmem>>, vector<4x8xf32>
    %cst = arith.constant dense<0.000000e+00> : vector<16x8xf32>
    %2 = tpu.matmul %0, %1, %cst {dimension_numbers = #tpu.dot_dimension_numbers<[1], [0], [0], [1], [0, 0, 1, 1], [], []>} : vector<16x4xf32>, vector<4x8xf32>, vector<16x8xf32> -> vector<16x8xf32>
    %c0_3 = arith.constant 0 : index
    %c0_4 = arith.constant 0 : index
    %3 = vector.load %arg3[%c0_3, %c0_4] : memref<1x8xf32, #tpu.memory_space<vmem>>, vector<1x8xf32>
    %4 = vector.broadcast %3 : vector<1x8xf32> to vector<16x8xf32>
    %5 = arith.addf %2, %4 : vector<16x8xf32>
    %cst_5 = arith.constant 0.000000e+00 : f32
    %6 = vector.broadcast %cst_5 : f32 to vector<16x8xf32>
    %7 = arith.maximumf %5, %6 : vector<16x8xf32>
    %c0_6 = arith.constant 0 : index
    %c0_7 = arith.constant 0 : index
    %8 = vector.load %arg4[%c0_6, %c0_7] : memref<8x9xf32, #tpu.memory_space<vmem>>, vector<8x9xf32>
    %cst_8 = arith.constant dense<0.000000e+00> : vector<16x9xf32>
    %9 = tpu.matmul %7, %8, %cst_8 {dimension_numbers = #tpu.dot_dimension_numbers<[1], [0], [0], [1], [0, 0, 1, 1], [], []>} : vector<16x8xf32>, vector<8x9xf32>, vector<16x9xf32> -> vector<16x9xf32>
    %c0_9 = arith.constant 0 : index
    %c0_10 = arith.constant 0 : index
    %10 = vector.load %arg5[%c0_9, %c0_10] : memref<1x9xf32, #tpu.memory_space<vmem>>, vector<1x9xf32>
    %11 = vector.broadcast %10 : vector<1x9xf32> to vector<16x9xf32>
    %12 = arith.addf %9, %11 : vector<16x9xf32>
    %cst_11 = arith.constant 0.000000e+00 : f32
    %13 = vector.broadcast %cst_11 : f32 to vector<16x9xf32>
    %14 = arith.maximumf %12, %13 : vector<16x9xf32>
    %c0_12 = arith.constant 0 : index
    %c0_13 = arith.constant 0 : index
    %15 = vector.load %arg6[%c0_12, %c0_13] : memref<9x3xf32, #tpu.memory_space<vmem>>, vector<9x3xf32>
    %cst_14 = arith.constant dense<0.000000e+00> : vector<16x3xf32>
    %16 = tpu.matmul %14, %15, %cst_14 {dimension_numbers = #tpu.dot_dimension_numbers<[1], [0], [0], [1], [0, 0, 1, 1], [], []>} : vector<16x9xf32>, vector<9x3xf32>, vector<16x3xf32> -> vector<16x3xf32>
    %c0_15 = arith.constant 0 : index
    %c0_16 = arith.constant 0 : index
    %17 = vector.load %arg7[%c0_15, %c0_16] : memref<1x3xf32, #tpu.memory_space<vmem>>, vector<1x3xf32>
    %18 = vector.broadcast %17 : vector<1x3xf32> to vector<16x3xf32>
    %19 = arith.addf %16, %18 : vector<16x3xf32>
    %c0_17 = arith.constant 0 : index
    %c0_18 = arith.constant 0 : index
    %20 = vector.load %arg8[%c0_17, %c0_18] : memref<16x3xf32, #tpu.memory_space<vmem>>, vector<16x3xf32>
    tpu.vector_store %arg8[%c0_17, %c0_18], %19 {strides = array<i32>} : memref<16x3xf32, #tpu.memory_space<vmem>>, vector<16x3xf32>,
    return
  }
  func.func @transform_0(%arg0: i32) -> (i32, i32) {
    %c0_i32 = arith.constant 0 : i32
    %c0_i32_0 = arith.constant 0 : i32
    return %arg0, %c0_i32 : i32, i32
  }
  func.func @transform_1(%arg0: i32) -> (i32, i32) {
    %c0_i32 = arith.constant 0 : i32
    %c0_i32_0 = arith.constant 0 : i32
    %c0_i32_1 = arith.constant 0 : i32
    return %c0_i32, %c0_i32_0 : i32, i32
  }
  func.func @transform_2(%arg0: i32) -> (i32, i32) {
    %c0_i32 = arith.constant 0 : i32
    %c0_i32_0 = arith.constant 0 : i32
    %c0_i32_1 = arith.constant 0 : i32
    return %c0_i32, %c0_i32_0 : i32, i32
  }
  func.func @transform_3(%arg0: i32) -> (i32, i32) {
    %c0_i32 = arith.constant 0 : i32
    %c0_i32_0 = arith.constant 0 : i32
    %c0_i32_1 = arith.constant 0 : i32
    return %c0_i32, %c0_i32_0 : i32, i32
  }
  func.func @transform_4(%arg0: i32) -> (i32, i32) {
    %c0_i32 = arith.constant 0 : i32
    %c0_i32_0 = arith.constant 0 : i32
    %c0_i32_1 = arith.constant 0 : i32
    return %c0_i32, %c0_i32_0 : i32, i32
  }
  func.func @transform_5(%arg0: i32) -> (i32, i32) {
    %c0_i32 = arith.constant 0 : i32
    %c0_i32_0 = arith.constant 0 : i32
    %c0_i32_1 = arith.constant 0 : i32
    return %c0_i32, %c0_i32_0 : i32, i32
  }
  func.func @transform_6(%arg0: i32) -> (i32, i32) {
    %c0_i32 = arith.constant 0 : i32
    %c0_i32_0 = arith.constant 0 : i32
    %c0_i32_1 = arith.constant 0 : i32
    return %c0_i32, %c0_i32_0 : i32, i32
  }
  func.func @transform_7(%arg0: i32) -> (i32, i32) {
    %c0_i32 = arith.constant 0 : i32
    %c0_i32_0 = arith.constant 0 : i32
    return %arg0, %c0_i32 : i32, i32
  }
}

</mosaic_0001>

<llo_original>
// kernel: mlp_forward.1
$region0: #{mlp_forward.1}
  #allocation0 [shape = 'u32[]', space=smem, size = 0x4, offset = 0x4, fixed_abs, tag = 'smem constant byte address 0x4 - core index']
  #allocation1 [shape = 'u32[144,128]{1,0:T(1,128)}', space=vmem, size = 0x12000, scoped, tag = 'internal scratch']
  %s0 = inlined_call_operand.vmem [shape: f32[32,4], index: 0, kind: input, shape index: {}]
  %s1 = inlined_call_operand.vmem [shape: f32[4,8], index: 1, kind: input, shape index: {}]
  %s2 = inlined_call_operand.vmem [shape: f32[1,8], index: 2, kind: input, shape index: {}]
  %s3 = inlined_call_operand.vmem [shape: f32[8,9], index: 3, kind: input, shape index: {}]
  %s4 = inlined_call_operand.vmem [shape: f32[1,9], index: 4, kind: input, shape index: {}]
  %s5 = inlined_call_operand.vmem [shape: f32[9,3], index: 5, kind: input, shape index: {}]
  %s6 = inlined_call_operand.vmem [shape: f32[1,3], index: 6, kind: input, shape index: {}]
  %s7 = inlined_call_operand.vmem [shape: f32[32,3], index: 7, kind: output, shape index: {}]
  %s8 = sld [smem:[#allocation0]]
  $region61: #{mlp_forward.1} parent=0
    _
  %s10 = ssub.s32 1, %s8
  %s11 = scalar_select 0, %s10, %s8
  loop: start=0, step=1, limit=4
  $region2: #{mlp_forward.1} parent=0 // loop_pre_header
    _
  $region3: #{mlp_forward.1} parent=0 // loop_header
    %s13 = sphi 0, %s17
    %p14 = scmp.ge.s32.totalorder %s13, 4
    %s23 = sphi 0, %s25
    %s26 = sphi 0, %s23
    %s27 = sphi 0, %s26
    %s43 = sphi 0, %s27
    %s47 = sphi 0, %s47
    %s49 = sphi 0, %s47
    %s50 = sphi 0, %s49
    %s64 = sphi 0, %s50
    %s68 = sphi 0, %s68
    %s70 = sphi 0, %s68
    %s71 = sphi 0, %s70
    %s85 = sphi 0, %s71
    %s89 = sphi 0, %s89
    %s91 = sphi 0, %s89
    %s92 = sphi 0, %s91
    %s106 = sphi 0, %s92
    %s110 = sphi 0, %s110
    %s112 = sphi 0, %s110
    %s113 = sphi 0, %s112
    %s127 = sphi 0, %s113
    %s131 = sphi 0, %s131
    %s133 = sphi 0, %s131
    %s134 = sphi 0, %s133
    %s148 = sphi 0, %s134
    %s152 = sphi 0, %s152
    %s154 = sphi 0, %s152
    %s155 = sphi 0, %s154
    %s169 = sphi 0, %s155
    %s175 = sphi 0, %s177
    %s178 = sphi 0, %s175
    %s179 = sphi 0, %s178
    %s195 = sphi 0, %s179
  $region4: #{mlp_forward.1} parent=0 // loop_header_branch
    %16 = sbr.rel (%p14) target = $region8
  $region5: #{mlp_forward.1} parent=0 // loop_body
    %s18 = ssub.s32 %s13, 1
    %s19 = ssub.s32 %s13, 2
    %s20 = sadd.s32 %s13, 1
    %s21 = ssub.s32 %s13, %s20
    %p22 = scmp.eq.s32.totalorder %s21, 0
    %s24 = sadd.s32 %s23, 1
    %s25 = scalar_select %p22, %s23, %s24
    %p28 = pneg %p22
    %p29 = scmp.eq.s32.totalorder %s13, 1
    %p30 = por %p28, %p29
    %p31 = scmp.ne.s32.totalorder %s23, %s26
    %p32 = scmp.eq.s32.totalorder %s13, 0
    %p33 = por %p31, %p32
    %p34 = scmp.ne.s32.totalorder %s23, %s26
    %p35 = scmp.eq.s32.totalorder %s18, 1
    %p36 = por %p34, %p35
    %p37 = scmp.ne.s32.totalorder %s26, %s27
    %p38 = scmp.eq.s32.totalorder %s18, 0
    %p39 = por %p37, %p38
    %p40 = scmp.ne.s32.totalorder %s26, %s27
    %p41 = scmp.eq.s32.totalorder %s19, 1
    %p42 = por %p40, %p41
    %p44 = scmp.ne.s32.totalorder %s27, %s43
    %p45 = scmp.eq.s32.totalorder %s19, 0
    %p46 = por %p44, %p45
    %s48 = sadd.s32 %s47, 1
    %p51 = scmp.eq.s32.totalorder %s13, 1
    %p52 = scmp.ne.s32.totalorder %s47, %s49
    %p53 = scmp.eq.s32.totalorder %s13, 0
    %p54 = por %p52, %p53
    %p55 = scmp.ne.s32.totalorder %s47, %s49
    %p56 = scmp.eq.s32.totalorder %s18, 1
    %p57 = por %p55, %p56
    %p58 = scmp.ne.s32.totalorder %s49, %s50
    %p59 = scmp.eq.s32.totalorder %s18, 0
    %p60 = por %p58, %p59
    %p61 = scmp.ne.s32.totalorder %s49, %s50
    %p62 = scmp.eq.s32.totalorder %s19, 1
    %p63 = por %p61, %p62
    %p65 = scmp.ne.s32.totalorder %s50, %s64
    %p66 = scmp.eq.s32.totalorder %s19, 0
    %p67 = por %p65, %p66
    %s69 = sadd.s32 %s68, 1
    %p72 = scmp.eq.s32.totalorder %s13, 1
    %p73 = scmp.ne.s32.totalorder %s68, %s70
    %p74 = scmp.eq.s32.totalorder %s13, 0
    %p75 = por %p73, %p74
    %p76 = scmp.ne.s32.totalorder %s68, %s70
    %p77 = scmp.eq.s32.totalorder %s18, 1
    %p78 = por %p76, %p77
    %p79 = scmp.ne.s32.totalorder %s70, %s71
    %p80 = scmp.eq.s32.totalorder %s18, 0
    %p81 = por %p79, %p80
    %p82 = scmp.ne.s32.totalorder %s70, %s71
    %p83 = scmp.eq.s32.totalorder %s19, 1
    %p84 = por %p82, %p83
    %p86 = scmp.ne.s32.totalorder %s71, %s85
    %p87 = scmp.eq.s32.totalorder %s19, 0
    %p88 = por %p86, %p87
    %s90 = sadd.s32 %s89, 1
    %p93 = scmp.eq.s32.totalorder %s13, 1
    %p94 = scmp.ne.s32.totalorder %s89, %s91
    %p95 = scmp.eq.s32.totalorder %s13, 0
    %p96 = por %p94, %p95
    %p97 = scmp.ne.s32.totalorder %s89, %s91
    %p98 = scmp.eq.s32.totalorder %s18, 1
    %p99 = por %p97, %p98
    %p100 = scmp.ne.s32.totalorder %s91, %s92
    %p101 = scmp.eq.s32.totalorder %s18, 0
    %p102 = por %p100, %p101
    %p103 = scmp.ne.s32.totalorder %s91, %s92
    %p104 = scmp.eq.s32.totalorder %s19, 1
    %p105 = por %p103, %p104
    %p107 = scmp.ne.s32.totalorder %s92, %s106
    %p108 = scmp.eq.s32.totalorder %s19, 0
    %p109 = por %p107, %p108
    %s111 = sadd.s32 %s110, 1
    %p114 = scmp.eq.s32.totalorder %s13, 1
    %p115 = scmp.ne.s32.totalorder %s110, %s112
    %p116 = scmp.eq.s32.totalorder %s13, 0
    %p117 = por %p115, %p116
    %p118 = scmp.ne.s32.totalorder %s110, %s112
    %p119 = scmp.eq.s32.totalorder %s18, 1
    %p120 = por %p118, %p119
    %p121 = scmp.ne.s32.totalorder %s112, %s113
    %p122 = scmp.eq.s32.totalorder %s18, 0
    %p123 = por %p121, %p122
    %p124 = scmp.ne.s32.totalorder %s112, %s113
    %p125 = scmp.eq.s32.totalorder %s19, 1
    %p126 = por %p124, %p125
    %p128 = scmp.ne.s32.totalorder %s113, %s127
    %p129 = scmp.eq.s32.totalorder %s19, 0
    %p130 = por %p128, %p129
    %s132 = sadd.s32 %s131, 1
    %p135 = scmp.eq.s32.totalorder %s13, 1
    %p136 = scmp.ne.s32.totalorder %s131, %s133
    %p137 = scmp.eq.s32.totalorder %s13, 0
    %p138 = por %p136, %p137
    %p139 = scmp.ne.s32.totalorder %s131, %s133
    %p140 = scmp.eq.s32.totalorder %s18, 1
    %p141 = por %p139, %p140
    %p142 = scmp.ne.s32.totalorder %s133, %s134
    %p143 = scmp.eq.s32.totalorder %s18, 0
    %p144 = por %p142, %p143
    %p145 = scmp.ne.s32.totalorder %s133, %s134
    %p146 = scmp.eq.s32.totalorder %s19, 1
    %p147 = por %p145, %p146
    %p149 = scmp.ne.s32.totalorder %s134, %s148
    %p150 = scmp.eq.s32.totalorder %s19, 0
    %p151 = por %p149, %p150
    %s153 = sadd.s32 %s152, 1
    %p156 = scmp.eq.s32.totalorder %s13, 1
    %p157 = scmp.ne.s32.totalorder %s152, %s154
    %p158 = scmp.eq.s32.totalorder %s13, 0
    %p159 = por %p157, %p158
    %p160 = scmp.ne.s32.totalorder %s152, %s154
    %p161 = scmp.eq.s32.totalorder %s18, 1
    %p162 = por %p160, %p161
    %p163 = scmp.ne.s32.totalorder %s154, %s155
    %p164 = scmp.eq.s32.totalorder %s18, 0
    %p165 = por %p163, %p164
    %p166 = scmp.ne.s32.totalorder %s154, %s155
    %p167 = scmp.eq.s32.totalorder %s19, 1
    %p168 = por %p166, %p167
    %p170 = scmp.ne.s32.totalorder %s155, %s169
    %p171 = scmp.eq.s32.totalorder %s19, 0
    %p172 = por %p170, %p171
    %s173 = ssub.s32 %s13, %s20
    %p174 = scmp.eq.s32.totalorder %s173, 0
    %s176 = sadd.s32 %s175, 1
    %s177 = scalar_select %p174, %s175, %s176
    %p180 = pneg %p174
    %p181 = scmp.eq.s32.totalorder %s13, 1
    %p182 = por %p180, %p181
    %p183 = scmp.ne.s32.totalorder %s175, %s178
    %p184 = scmp.eq.s32.totalorder %s13, 0
    %p185 = por %p183, %p184
    %p186 = scmp.ne.s32.totalorder %s175, %s178
    %p187 = scmp.eq.s32.totalorder %s18, 1
    %p188 = por %p186, %p187
    %p189 = scmp.ne.s32.totalorder %s178, %s179
    %p190 = scmp.eq.s32.totalorder %s18, 0
    %p191 = por %p189, %p190
    %p192 = scmp.ne.s32.totalorder %s178, %s179
    %p193 = scmp.eq.s32.totalorder %s19, 1
    %p194 = por %p192, %p193
    %p196 = scmp.ne.s32.totalorder %s179, %s195
    %p197 = scmp.eq.s32.totalorder %s19, 0
    %p198 = por %p196, %p197
    %p199 = scmp.le.s32.totalorder 1, %s13
    %p200 = scmp.lt.s32.totalorder %s13, 3
    %p201 = pnand %p199, %p200
    %p202 = pneg %p201
    // Predicated region
    $region9: #{mlp_forward.1} parent=5 // pred_check
      _
    $region10: #{mlp_forward.1} parent=5 // pred_check_branch
      %204 = sbr.rel (%p201) target = $region12
    $region11: #{mlp_forward.1} parent=5 // pred_region
      %s205 = ssub.s32 %s13, 1
      // Predicated region
      $region13: #{mlp_forward.1} parent=11 // pred_check
        %p206 = pneg %p60
      $region14: #{mlp_forward.1} parent=11 // pred_check_branch
        %208 = sbr.rel (%p206) target = $region16
      $region15: #{mlp_forward.1} parent=11 // pred_region
        _
      $region16: #{mlp_forward.1} parent=11 // pred_fallthru
        _
      // Predicated region
      $region17: #{mlp_forward.1} parent=11 // pred_check
        %p209 = pneg %p81
      $region18: #{mlp_forward.1} parent=11 // pred_check_branch
        %211 = sbr.rel (%p209) target = $region20
      $region19: #{mlp_forward.1} parent=11 // pred_region
        _
      $region20: #{mlp_forward.1} parent=11 // pred_fallthru
        _
      // Predicated region
      $region21: #{mlp_forward.1} parent=11 // pred_check
        %p212 = pneg %p102
      $region22: #{mlp_forward.1} parent=11 // pred_check_branch
        %214 = sbr.rel (%p212) target = $region24
      $region23: #{mlp_forward.1} parent=11 // pred_region
        _
      $region24: #{mlp_forward.1} parent=11 // pred_fallthru
        _
      // Predicated region
      $region25: #{mlp_forward.1} parent=11 // pred_check
        %p215 = pneg %p123
      $region26: #{mlp_forward.1} parent=11 // pred_check_branch
        %217 = sbr.rel (%p215) target = $region28
      $region27: #{mlp_forward.1} parent=11 // pred_region
        _
      $region28: #{mlp_forward.1} parent=11 // pred_fallthru
        _
      // Predicated region
      $region29: #{mlp_forward.1} parent=11 // pred_check
        %p218 = pneg %p144
      $region30: #{mlp_forward.1} parent=11 // pred_check_branch
        %220 = sbr.rel (%p218) target = $region32
      $region31: #{mlp_forward.1} parent=11 // pred_region
        _
      $region32: #{mlp_forward.1} parent=11 // pred_fallthru
        _
      // Predicated region
      $region33: #{mlp_forward.1} parent=11 // pred_check
        %p221 = pneg %p165
      $region34: #{mlp_forward.1} parent=11 // pred_check_branch
        %223 = sbr.rel (%p221) target = $region36
      $region35: #{mlp_forward.1} parent=11 // pred_region
        _
      $region36: #{mlp_forward.1} parent=11 // pred_fallthru
        _
    $region12: #{mlp_forward.1} parent=5 // pred_fallthru
      _
    %p224 = scmp.lt.s32.totalorder %s13, 2
    // Predicated region
    $region37: #{mlp_forward.1} parent=5 // pred_check
      %p225 = pneg %p224
    $region38: #{mlp_forward.1} parent=5 // pred_check_branch
      %227 = sbr.rel (%p225) target = $region40
    $region39: #{mlp_forward.1} parent=5 // pred_region
      // Predicated region
      $region41: #{mlp_forward.1} parent=39 // pred_check
        %p228 = pneg %p33
      $region42: #{mlp_forward.1} parent=39 // pred_check_branch
        %230 = sbr.rel (%p228) target = $region44
      $region43: #{mlp_forward.1} parent=39 // pred_region
        %s231 = smul.u32 2, %s13
        %p232 = scmp.lt.s32.totalorder %s231, 3
        %s233 = scalar_select %p232, %s231, 3
        %s234 = smul.addr %s233, 8
        %s235 = scalar_lea.vmem %s0, %s234
        %s236 = smul.u32 2, %s13
      $region44: #{mlp_forward.1} parent=39 // pred_fallthru
        _
    $region40: #{mlp_forward.1} parent=5 // pred_fallthru
      _
    %p237 = scmp.le.s32.totalorder 1, %s13
    %p238 = scmp.lt.s32.totalorder %s13, 3
    %p239 = pnand %p237, %p238
    %p240 = pneg %p239
    // Predicated region
    $region45: #{mlp_forward.1} parent=5 // pred_check
      _
    $region46: #{mlp_forward.1} parent=5 // pred_check_branch
      %242 = sbr.rel (%p239) target = $region48
    $region47: #{mlp_forward.1} parent=5 // pred_region
      %s243 = ssub.s32 %s13, 1
      %s244 = smul.u32 2, %s18
      %p245 = scmp.lt.s32.totalorder %s244, 3
      %s246 = scalar_select %p245, %s244, 3
      %s247 = smul.addr %s246, 8
      %s248 = scalar_lea.vmem %s0, %s247
      %p249 = pneg %p39
      %p250 = pneg %p36
      %p251 = pneg %p60
      %p252 = pneg %p57
      %p253 = pneg %p81
      %p254 = pneg %p78
      %p255 = pneg %p102
      %p256 = pneg %p99
      %p257 = pneg %p123
      %p258 = pneg %p120
      %p259 = pneg %p144
      %p260 = pneg %p141
      %p261 = pneg %p165
      %p262 = pneg %p162
      %p263 = pneg %p191
      %p264 = pneg %p188
      %s265 = smul.u32 2, %s18
      %p266 = scmp.lt.s32.totalorder %s265, 3
      %s267 = scalar_select %p266, %s265, 3
      %s268 = smul.addr %s267, 8
      %s269 = scalar_lea.vmem %s7, %s268
      %s270 = smul.u32 2, %s18
      %p271 = scmp.lt.s32.totalorder %s270, 3
      %s272 = scalar_select %p271, %s270, 3
      %s273 = smul.addr %s272, 8
      %s274 = scalar_lea.vmem %s0, %s273
      %s275 = smul.u32 2, %s18
      %s276 = smul.u32 2, %s18
      %p277 = scmp.lt.s32.totalorder %s276, 3
      %s278 = scalar_select %p277, %s276, 3
      %s279 = smul.addr %s278, 8
      %s280 = scalar_lea.vmem %s7, %s279
      %s281 = smul.u32 2, %s18
      %v282 = vld [vmem:[%s274] sm:$0xff]
      %v283 = vld [vmem:[%s274 + $0x8] sm:$0xff]
      %v284 = vld [vmem:[%s1] sm:$0xf]
      %v285 = vld [vmem:[%s2] sm:$0x1]
      %v287 = vlaneseq
      %v288 = vshrl.u32 %v287, 7
      %v289 = vsub.s32 0, %v288
      %v290 = vrot.slane %v285, %v289
      %vm292 = vcmask 31744
      %v294 = vsel %vm292, %v282, 0
      %v297 = vsel %vm292, %v283, 0
      %vm299 = vcmask 1043456
      %v301 = vsel %vm299, %v284, 0
      %303 = vmatprep.subr.mxu0 0.0
      %304 = vmatpush1.msra.mxu0 %v301
      %305 = vmatprep.subr.mxu0 0.0
      %306 = vmatpush1.msra.mxu0 0.0
      %307 = vmatprep.subr.mxu0 0.0
      %308 = vmatpush1.msra.mxu0 0.0
      %309 = vmatprep.subr.mxu0 0.0
      %310 = vmatpush1.msra.mxu0 0.0
      %311 = vmatprep.subr.mxu0 0.0
      %312 = vmatpush1.msra.mxu0 0.0
      %313 = vmatprep.subr.mxu0 0.0
      %314 = vmatpush1.msra.mxu0 0.0
      %315 = vmatprep.subr.mxu0 0.0
      %316 = vmatpush1.msra.mxu0 0.0
      %317 = vmatprep.subr.mxu0 0.0
      %318 = vmatpush1.msra.mxu0 0.0
      %319 = vmatprep.subr.mxu0 0.0
      %320 = vmatpush1.msra.mxu0 0.0
      %321 = vmatprep.subr.mxu0 0.0
      %322 = vmatpush1.msra.mxu0 0.0
      %323 = vmatprep.subr.mxu0 0.0
      %324 = vmatpush1.msra.mxu0 0.0
      %325 = vmatprep.subr.mxu0 0.0
      %326 = vmatpush1.msra.mxu0 0.0
      %327 = vmatprep.subr.mxu0 0.0
      %328 = vmatpush1.msra.mxu0 0.0
      %329 = vmatprep.subr.mxu0 0.0
      %330 = vmatpush1.msra.mxu0 0.0
      %331 = vmatprep.subr.mxu0 0.0
      %332 = vmatpush1.msra.mxu0 0.0
      %333 = vmatprep.subr.mxu0 0.0
      %334 = vmatpush1.msra.mxu0 0.0
      %335 = vmatprep.subr.mxu0 0.0
      %336 = vmatpush1.msra.mxu0 0.0
      %337 = vmatprep.subr.mxu0 0.0
      %338 = vmatpush1.msra.mxu0 0.0
      %339 = vmatprep.subr.mxu0 0.0
      %340 = vmatpush1.msra.mxu0 0.0
      %341 = vmatprep.subr.mxu0 0.0
      %342 = vmatpush1.msra.mxu0 0.0
      %343 = vmatprep.subr.mxu0 0.0
      %344 = vmatpush1.msra.mxu0 0.0
      %345 = vmatprep.subr.mxu0 0.0
      %346 = vmatpush1.msra.mxu0 0.0
      %347 = vmatprep.subr.mxu0 0.0
      %348 = vmatpush1.msra.mxu0 0.0
      %349 = vmatprep.subr.mxu0 0.0
      %350 = vmatpush1.msra.mxu0 0.0
      %351 = vmatprep.subr.mxu0 0.0
      %352 = vmatpush1.msra.mxu0 0.0
      %353 = vmatprep.subr.mxu0 0.0
      %354 = vmatpush1.msra.mxu0 0.0
      %355 = vmatprep.subr.mxu0 0.0
      %356 = vmatpush1.msra.mxu0 0.0
      %357 = vmatprep.subr.mxu0 0.0
      %358 = vmatpush1.msra.mxu0 0.0
      %359 = vmatprep.subr.mxu0 0.0
      %360 = vmatpush1.msra.mxu0 0.0
      %361 = vmatprep.subr.mxu0 0.0
      %362 = vmatpush1.msra.mxu0 0.0
      %363 = vmatprep.subr.mxu0 0.0
      %364 = vmatpush1.msra.mxu0 0.0
      %365 = vmatprep.subr.mxu0 0.0
      %366 = vmatpush1.msra.mxu0 0.0
      %367 = vmatprep.mubr.f32.mxu0 0.0
      %368 = vmatmul.mubr.f32.gmra.mrb[0].mxu0 %v294
      %v369 = vpop.f32.mrb[0].mxu0
      %v370 = vadd.f32 %v290, %v369
      %v371 = vpop.f32.mrb[0].mxu0
      %372 = vmatprep.mubr.f32.mxu0 0.0
      %373 = vmatmul.mubr.f32.gmra.mrb[0].mxu0 %v297
      %v374 = vpop.f32.mrb[0].mxu0
      %v375 = vadd.f32 %v290, %v374
      %v376 = vpop.f32.mrb[0].mxu0
      %377 = vdwg.mxu0
      %v378 = vmax.f32 %v370, 0.0
      %v379 = vmax.f32 %v375, 0.0
      %v380 = vld [vmem:[%s3] sm:$0xff]
      %v381 = vld [vmem:[%s4] sm:$0x1]
      %v383 = vlaneseq
      %v384 = vshrl.u32 %v383, 7
      %v385 = vsub.s32 0, %v384
      %v386 = vrot.slane %v381, %v385
      %vm388 = vcmask 64512
      %v390 = vsel %vm388, %v378, 0
      %v393 = vsel %vm388, %v379, 0
      %395 = vmatprep.subr.mxu0 0.0
      %396 = vmatpush1.msra.mxu0 %v380
      %397 = vmatprep.subr.mxu0 0.0
      %398 = vmatpush1.msra.mxu0 0.0
      %399 = vmatprep.subr.mxu0 0.0
      %400 = vmatpush1.msra.mxu0 0.0
      %401 = vmatprep.subr.mxu0 0.0
      %402 = vmatpush1.msra.mxu0 0.0
      %403 = vmatprep.subr.mxu0 0.0
      %404 = vmatpush1.msra.mxu0 0.0
      %405 = vmatprep.subr.mxu0 0.0
      %406 = vmatpush1.msra.mxu0 0.0
      %407 = vmatprep.subr.mxu0 0.0
      %408 = vmatpush1.msra.mxu0 0.0
      %409 = vmatprep.subr.mxu0 0.0
      %410 = vmatpush1.msra.mxu0 0.0
      %411 = vmatprep.subr.mxu0 0.0
      %412 = vmatpush1.msra.mxu0 0.0
      %413 = vmatprep.subr.mxu0 0.0
      %414 = vmatpush1.msra.mxu0 0.0
      %415 = vmatprep.subr.mxu0 0.0
      %416 = vmatpush1.msra.mxu0 0.0
      %417 = vmatprep.subr.mxu0 0.0
      %418 = vmatpush1.msra.mxu0 0.0
      %419 = vmatprep.subr.mxu0 0.0
      %420 = vmatpush1.msra.mxu0 0.0
      %421 = vmatprep.subr.mxu0 0.0
      %422 = vmatpush1.msra.mxu0 0.0
      %423 = vmatprep.subr.mxu0 0.0
      %424 = vmatpush1.msra.mxu0 0.0
      %425 = vmatprep.subr.mxu0 0.0
      %426 = vmatpush1.msra.mxu0 0.0
      %427 = vmatprep.subr.mxu0 0.0
      %428 = vmatpush1.msra.mxu0 0.0
      %429 = vmatprep.subr.mxu0 0.0
      %430 = vmatpush1.msra.mxu0 0.0
      %431 = vmatprep.subr.mxu0 0.0
      %432 = vmatpush1.msra.mxu0 0.0
      %433 = vmatprep.subr.mxu0 0.0
      %434 = vmatpush1.msra.mxu0 0.0
      %435 = vmatprep.subr.mxu0 0.0
      %436 = vmatpush1.msra.mxu0 0.0
      %437 = vmatprep.subr.mxu0 0.0
      %438 = vmatpush1.msra.mxu0 0.0
      %439 = vmatprep.subr.mxu0 0.0
      %440 = vmatpush1.msra.mxu0 0.0
      %441 = vmatprep.subr.mxu0 0.0
      %442 = vmatpush1.msra.mxu0 0.0
      %443 = vmatprep.subr.mxu0 0.0
      %444 = vmatpush1.msra.mxu0 0.0
      %445 = vmatprep.subr.mxu0 0.0
      %446 = vmatpush1.msra.mxu0 0.0
      %447 = vmatprep.subr.mxu0 0.0
      %448 = vmatpush1.msra.mxu0 0.0
      %449 = vmatprep.subr.mxu0 0.0
      %450 = vmatpush1.msra.mxu0 0.0
      %451 = vmatprep.subr.mxu0 0.0
      %452 = vmatpush1.msra.mxu0 0.0
      %453 = vmatprep.subr.mxu0 0.0
      %454 = vmatpush1.msra.mxu0 0.0
      %455 = vmatprep.subr.mxu0 0.0
      %456 = vmatpush1.msra.mxu0 0.0
      %457 = vmatprep.subr.mxu0 0.0
      %458 = vmatpush1.msra.mxu0 0.0
      %459 = vmatprep.mubr.f32.mxu0 0.0
      %460 = vmatmul.mubr.f32.gmra.mrb[0].mxu0 %v390
      %v461 = vpop.f32.mrb[0].mxu0
      %v462 = vadd.f32 %v386, %v461
      %v463 = vpop.f32.mrb[0].mxu0
      %464 = vmatprep.mubr.f32.mxu0 0.0
      %465 = vmatmul.mubr.f32.gmra.mrb[0].mxu0 %v393
      %v466 = vpop.f32.mrb[0].mxu0
      %v467 = vadd.f32 %v386, %v466
      %v468 = vpop.f32.mrb[0].mxu0
      %469 = vdwg.mxu0
      %v470 = vmax.f32 %v462, 0.0
      %v471 = vmax.f32 %v467, 0.0
      %v472 = vld [vmem:[%s5] sm:$0xff]
      %v473 = vld [vmem:[%s5 + $0x8] sm:$0x1]
      %v474 = vld [vmem:[%s6] sm:$0x1]
      %v476 = vlaneseq
      %v477 = vshrl.u32 %v476, 7
      %v478 = vsub.s32 0, %v477
      %v479 = vrot.slane %v474, %v478
      %vm481 = vcmask 72704
      %v483 = vsel %vm481, %v470, 0
      %v486 = vsel %vm481, %v471, 0
      %vm488 = vcmask 1040384
      %v490 = vsel %vm488, %v473, 0
      %492 = vmatprep.subr.mxu0 0.0
      %493 = vmatpush1.msra.mxu0 %v472
      %494 = vmatprep.subr.mxu0 0.0
      %495 = vmatpush1.msra.mxu0 %v490
      %496 = vmatprep.subr.mxu0 0.0
      %497 = vmatpush1.msra.mxu0 0.0
      %498 = vmatprep.subr.mxu0 0.0
      %499 = vmatpush1.msra.mxu0 0.0
      %500 = vmatprep.subr.mxu0 0.0
      %501 = vmatpush1.msra.mxu0 0.0
      %502 = vmatprep.subr.mxu0 0.0
      %503 = vmatpush1.msra.mxu0 0.0
      %504 = vmatprep.subr.mxu0 0.0
      %505 = vmatpush1.msra.mxu0 0.0
      %506 = vmatprep.subr.mxu0 0.0
      %507 = vmatpush1.msra.mxu0 0.0
      %508 = vmatprep.subr.mxu0 0.0
      %509 = vmatpush1.msra.mxu0 0.0
      %510 = vmatprep.subr.mxu0 0.0
      %511 = vmatpush1.msra.mxu0 0.0
      %512 = vmatprep.subr.mxu0 0.0
      %513 = vmatpush1.msra.mxu0 0.0
      %514 = vmatprep.subr.mxu0 0.0
      %515 = vmatpush1.msra.mxu0 0.0
      %516 = vmatprep.subr.mxu0 0.0
      %517 = vmatpush1.msra.mxu0 0.0
      %518 = vmatprep.subr.mxu0 0.0
      %519 = vmatpush1.msra.mxu0 0.0
      %520 = vmatprep.subr.mxu0 0.0
      %521 = vmatpush1.msra.mxu0 0.0
      %522 = vmatprep.subr.mxu0 0.0
      %523 = vmatpush1.msra.mxu0 0.0
      %524 = vmatprep.subr.mxu0 0.0
      %525 = vmatpush1.msra.mxu0 0.0
      %526 = vmatprep.subr.mxu0 0.0
      %527 = vmatpush1.msra.mxu0 0.0
      %528 = vmatprep.subr.mxu0 0.0
      %529 = vmatpush1.msra.mxu0 0.0
      %530 = vmatprep.subr.mxu0 0.0
      %531 = vmatpush1.msra.mxu0 0.0
      %532 = vmatprep.subr.mxu0 0.0
      %533 = vmatpush1.msra.mxu0 0.0
      %534 = vmatprep.subr.mxu0 0.0
      %535 = vmatpush1.msra.mxu0 0.0
      %536 = vmatprep.subr.mxu0 0.0
      %537 = vmatpush1.msra.mxu0 0.0
      %538 = vmatprep.subr.mxu0 0.0
      %539 = vmatpush1.msra.mxu0 0.0
      %540 = vmatprep.subr.mxu0 0.0
      %541 = vmatpush1.msra.mxu0 0.0
      %542 = vmatprep.subr.mxu0 0.0
      %543 = vmatpush1.msra.mxu0 0.0
      %544 = vmatprep.subr.mxu0 0.0
      %545 = vmatpush1.msra.mxu0 0.0
      %546 = vmatprep.subr.mxu0 0.0
      %547 = vmatpush1.msra.mxu0 0.0
      %548 = vmatprep.subr.mxu0 0.0
      %549 = vmatpush1.msra.mxu0 0.0
      %550 = vmatprep.subr.mxu0 0.0
      %551 = vmatpush1.msra.mxu0 0.0
      %552 = vmatprep.subr.mxu0 0.0
      %553 = vmatpush1.msra.mxu0 0.0
      %554 = vmatprep.subr.mxu0 0.0
      %555 = vmatpush1.msra.mxu0 0.0
      %556 = vmatprep.mubr.f32.mxu0 0.0
      %557 = vmatmul.mubr.f32.gmra.mrb[0].mxu0 %v483
      %v558 = vpop.f32.mrb[0].mxu0
      %v559 = vadd.f32 %v479, %v558
      %v560 = vpop.f32.mrb[0].mxu0
      %561 = vmatprep.mubr.f32.mxu0 0.0
      %562 = vmatmul.mubr.f32.gmra.mrb[0].mxu0 %v486
      %v563 = vpop.f32.mrb[0].mxu0
      %v564 = vadd.f32 %v479, %v563
      %v565 = vpop.f32.mrb[0].mxu0
      %566 = vdwg.mxu0
      %vm567 = vcmask 23552
      %568 = vst.msk [vmem:[%s280] sm:$0xff] %vm567, %v559
      %569 = vst.msk [vmem:[%s280 + $0x8] sm:$0xff] %vm567, %v564
      %s570 = smul.u32 2, %s18
      %p571 = scmp.lt.s32.totalorder %s570, 3
      %s572 = scalar_select %p571, %s570, 3
      %s573 = smul.addr %s572, 8
      %s574 = scalar_lea.vmem %s7, %s573
      // Predicated region
      $region49: #{mlp_forward.1} parent=47 // pred_check
        %p575 = pneg %p188
      $region50: #{mlp_forward.1} parent=47 // pred_check_branch
        %577 = sbr.rel (%p575) target = $region52
      $region51: #{mlp_forward.1} parent=47 // pred_region
        %s578 = smul.u32 2, %s18
      $region52: #{mlp_forward.1} parent=47 // pred_fallthru
        _
    $region48: #{mlp_forward.1} parent=5 // pred_fallthru
      _
    %p579 = scmp.le.s32.totalorder 2, %s13
    // Predicated region
    $region53: #{mlp_forward.1} parent=5 // pred_check
      %p580 = pneg %p579
    $region54: #{mlp_forward.1} parent=5 // pred_check_branch
      %582 = sbr.rel (%p580) target = $region56
    $region55: #{mlp_forward.1} parent=5 // pred_region
      %s583 = ssub.s32 %s13, 2
      // Predicated region
      $region57: #{mlp_forward.1} parent=55 // pred_check
        %p584 = pneg %p194
      $region58: #{mlp_forward.1} parent=55 // pred_check_branch
        %586 = sbr.rel (%p584) target = $region60
      $region59: #{mlp_forward.1} parent=55 // pred_region
        %s587 = smul.u32 2, %s19
        %p588 = scmp.lt.s32.totalorder %s587, 3
        %s589 = scalar_select %p588, %s587, 3
        %s590 = smul.addr %s589, 8
        %s591 = scalar_lea.vmem %s7, %s590
      $region60: #{mlp_forward.1} parent=55 // pred_fallthru
        _
    $region56: #{mlp_forward.1} parent=5 // pred_fallthru
      _
  $region6: #{mlp_forward.1} parent=0 // loop_footer
    %s17 = sadd.s32 1, %s13
  $region7: #{mlp_forward.1} parent=0 // loop_footer_branch
    %12 = sbr.rel target = $region3
  $region8: #{mlp_forward.1} parent=0 // loop_exit
    _

</llo_original>
